<compile_context>
chip_gen: v5e
topology: v5e:2x2
jax: 0.10.0
libtpu: 0.0.40
codegen_flags: <defaults>
</compile_context>

<pallas_src>
import jax
import jax.numpy as jnp
from jax import lax
from jax.experimental import pallas as pl
from jax.experimental.pallas import tpu as pltpu


def _round_up(n, m):
    return ((n + m - 1) // m) * m


def _pad2(x, rows, cols):
    r, c = x.shape
    return jnp.pad(x, ((0, rows - r), (0, cols - c)))


def actor_logits_kernel(ids_ref, bid_ref, table_ref, wv_ref, bv_ref, out_ref, h_ref):
    """Fused per-(B*T)-row decoder hot path.

    ids,bid : (R,1)  i32   token id / (V + batch id) per flattened row
    table   : (Va,Dp) bf16 [embedding rows ; per-batch context rows] (grid-invariant)
    wv      : (Dp,tv) bf16 vocab-head weight tile
    bv      : (1,tv)  f32  vocab-head bias tile
    out     : (R,tv)  f32  logits tile
    h       : (R,Dp)  bf16 VMEM scratch: tok + ctx hidden, reused across vocab tiles
    """
    vj = pl.program_id(1)

    # Hidden state (embedding gather + context add) is vocab-tile invariant:
    # compute it once per row block and reuse for every vocab tile.
    @pl.when(vj == 0)
    def _():
        rows = ids_ref.shape[0]
        v_aug = table_ref.shape[0]
        # One-hot gather over the *augmented* table: column `id` selects the
        # token-embedding row, column `V + batch` selects that batch's
        # (precomputed) context row, so a single bf16 MXU matmul with f32
        # accumulation yields tok + ctx in one pass.  One-hot built directly
        # in bf16 (no f32 intermediate).
        iota = lax.broadcasted_iota(jnp.int32, (rows, v_aug), 1)
        onehot = ((iota == ids_ref[...]) | (iota == bid_ref[...])).astype(jnp.bfloat16)
        h = jnp.dot(onehot, table_ref[...], preferred_element_type=jnp.float32)
        h_ref[...] = h.astype(h_ref.dtype)

    # Vocab head tile: logits = h @ W_vocab[:, tile] + b[tile]  (bf16 MXU, f32 acc).
    logits = jnp.dot(h_ref[...], wv_ref[...], preferred_element_type=jnp.float32)
    out_ref[...] = logits + bv_ref[...]


def _choose_rows(bt, v_aug_pad, d_pad, tv, budget_bytes):
    """Pick (BT_pad, block_rows): largest row tile within the VMEM budget,
    split into >= 2 row blocks when possible so the "parallel" row axis can
    shard across v7x's two TensorCores (a 1-extra grid step is noise on
    single-TC v5e/v6e)."""
    # bytes that scale with block_rows: f32 out tile (x2 buffers) + bf16 one-hot
    # intermediate + bf16 hidden scratch
    per_row = tv * 4 * 2 + v_aug_pad * 2 + d_pad * 2
    # grid-invariant residents: table (1 buffer via Buffered(1)) + wv/bv (x2 buffers)
    fixed = v_aug_pad * d_pad * 2 + (d_pad * tv * 2 + tv * 4) * 2
    cap = max(8, min(1024, ((budget_bytes - fixed) // per_row) // 8 * 8))

    bt8 = _round_up(bt, 8)
    if bt8 <= cap:
        if bt8 >= 16:
            bt_pad = _round_up(bt, 16)
            return bt_pad, bt_pad // 2          # 2 row blocks, each a multiple of 8
        return bt8, bt8
    bt_pad = _round_up(bt, cap)
    return bt_pad, cap


_VMEM_BUDGET = 40 * 1024 * 1024     # conservative for v7x's 64 MiB physical VMEM


@jax.jit
def actor_forward(encoded_input, seq, params):
    """encoded_input: (B, S_enc, D_enc) f32; seq: (B, T+1) int -> logits (B, T, V)."""
    embed, w_ctx, w_vocab, b_vocab = params

    # TODO(synk): reference `self.decoder` architecture is an unspecified external
    # dependency; a deterministic stand-in decoder (token embedding + mean-pooled
    # context projection + linear vocab head) mirrors
    # `_, (logits, _) = decoder(seq, context=encoded_input, return_outputs=True)`.

    B, seq_len_p1 = seq.shape
    T = seq_len_p1 - 1
    V, D = embed.shape

    D_pad = _round_up(D, 128)
    V_pad = _round_up(V, 128)
    V_aug_pad = _round_up(V + B, 128)       # embedding rows + B context rows, padded
    tv = min(V_pad, 512)                    # vocab-head lane tile (multiple of 128)

    BT = B * T
    BT_pad, block_rows = _choose_rows(BT, V_aug_pad, D_pad, tv, _VMEM_BUDGET)

    # ---- wrapper-side layout plumbing & grid-invariant hoisting (all tiny) ----
    # Context path hoisted out of the kernel (was recomputed every grid step):
    # its B rows are appended to the embedding table (explicit bf16 cast once,
    # so MXU precision is deterministic rather than implicit f32->bf16 demotion).
    ctx = jnp.mean(encoded_input, axis=1) @ w_ctx                  # (B, D) f32, tiny
    table = jnp.concatenate([embed, ctx], axis=0)                  # (V+B, D)
    table_p = _pad2(table, V_aug_pad, D_pad).astype(jnp.bfloat16)
    w_vocab_p = _pad2(w_vocab, D_pad, V_pad).astype(jnp.bfloat16)
    b_vocab_p = _pad2(b_vocab.reshape(1, V), 1, V_pad).astype(jnp.float32)

    ids = seq[:, :-1].astype(jnp.int32).reshape(BT, 1)
    ids = jnp.pad(ids, ((0, BT_pad - BT), (0, 0)))                 # pad rows -> token 0
    # Padded rows (>= BT) get batch id clamped to B -> they hit a zero-padded table
    # row (zero ctx) and token row 0; their outputs are garbage-but-finite and are
    # sliced off below (this slicing is load-bearing).
    row_batch = jnp.minimum(jnp.arange(BT_pad, dtype=jnp.int32) // T, B)
    aug_bid = (V + row_batch).reshape(BT_pad, 1)

    grid = (BT_pad // block_rows, V_pad // tv)

    out = pl.pallas_call(
        actor_logits_kernel,
        out_shape=jax.ShapeDtypeStruct((BT_pad, V_pad), jnp.float32),
        grid=grid,
        in_specs=[
            pl.BlockSpec((block_rows, 1), lambda i, vj: (i, 0)),       # token ids
            pl.BlockSpec((block_rows, 1), lambda i, vj: (i, 0)),       # V + batch id
            pl.BlockSpec((V_aug_pad, D_pad), lambda i, vj: (0, 0),     # emb ++ ctx table
                         pipeline_mode=pl.Buffered(1)),                # grid-invariant
            pl.BlockSpec((D_pad, tv), lambda i, vj: (0, vj)),          # vocab head W tile
            pl.BlockSpec((1, tv), lambda i, vj: (0, vj)),              # vocab head b tile
        ],
        out_specs=pl.BlockSpec((block_rows, tv), lambda i, vj: (i, vj)),
        scratch_shapes=[pltpu.VMEM((block_rows, D_pad), jnp.bfloat16)],  # hidden h
        compiler_params=pltpu.CompilerParams(
            dimension_semantics=("parallel", "arbitrary"),
            vmem_limit_bytes=48 * 1024 * 1024),
    )(ids, aug_bid, table_p, w_vocab_p, b_vocab_p)

    # slice off row/lane padding; reshape back to (B, T, V)  (layout plumbing)
    return out[:BT, :V].reshape(B, T, V)


if __name__ == "__main__":
    # Small shapes consistent with the module: generate(seq_len=20) => T = 20,
    # so the training sequence has length T + 1 = 21.
    B, T, V, D, S_ENC, D_ENC = 2, 20, 32, 32, 8, 16

    key = jax.random.PRNGKey(0)
    k_enc, k_seq, k_emb, k_ctx, k_voc, k_bv = jax.random.split(key, 6)

    encoded_input = jax.random.normal(k_enc, (B, S_ENC, D_ENC), dtype=jnp.float32)
    seq = jax.random.randint(k_seq, (B, T + 1), 0, V, dtype=jnp.int32)

    # Deterministic synthetic stand-in decoder parameters.
    embed = jax.random.normal(k_emb, (V, D), dtype=jnp.float32) * 0.1
    w_ctx = jax.random.normal(k_ctx, (D_ENC, D), dtype=jnp.float32) * 0.1
    w_vocab = jax.random.normal(k_voc, (D, V), dtype=jnp.float32) * 0.1
    b_vocab = jax.random.normal(k_bv, (V,), dtype=jnp.float32) * 0.1

    params = (embed, w_ctx, w_vocab, b_vocab)

    logits = jax.block_until_ready(actor_forward(encoded_input, seq, params))

    # Pure-JAX f32 reference for the same stand-in decoder (bf16 weights in the
    # kernel bound accuracy to ~2-3 significant digits; tolerance set accordingly).
    tok_ref = embed[seq[:, :-1]]
    ctx_ref = jnp.mean(encoded_input, axis=1) @ w_ctx
    ref = (tok_ref + ctx_ref[:, None, :]) @ w_vocab + b_vocab

    assert logits.shape == (B, T, V)
    assert bool(jnp.all(jnp.isfinite(logits)))
    assert bool(jnp.allclose(logits, ref, atol=2e-2, rtol=2e-2))
    print("KERNEL_OK")
</pallas_src>

<mosaic_0001>
module attributes {stable_mosaic.version = 11 : i64} {
  func.func @actor_logits_kernel(%arg0: i32, %arg1: i32, %arg2: memref<24x1xi32, #tpu.memory_space<vmem>>, %arg3: memref<24x1xi32, #tpu.memory_space<vmem>>, %arg4: memref<128x128xbf16, #tpu.memory_space<vmem>>, %arg5: memref<128x128xbf16, #tpu.memory_space<vmem>>, %arg6: memref<1x128xf32, #tpu.memory_space<vmem>>, %arg7: memref<24x128xf32, #tpu.memory_space<vmem>>, %arg8: memref<24x128xbf16, #tpu.memory_space<vmem>>) attributes {dimension_semantics = [#tpu.dimension_semantics<parallel>, #tpu.dimension_semantics<arbitrary>], iteration_bounds = array<i64: 2, 1>, scalar_prefetch = 0 : i64, scratch_operands = 1 : i64, tpu.core_type = #tpu.core_type<tc>, window_params = [{transform_indices = @transform_0, window_bounds = array<i64: 24, 1>}, {transform_indices = @transform_1, window_bounds = array<i64: 24, 1>}, {pipeline_mode = #tpu.pipeline_mode<synchronous>, transform_indices = @transform_2, window_bounds = array<i64: 128, 128>}, {transform_indices = @transform_3, window_bounds = array<i64: 128, 128>}, {transform_indices = @transform_4, window_bounds = array<i64: 1, 128>}, {transform_indices = @transform_5, window_bounds = array<i64: 24, 128>}]} {
    %c0_i32 = arith.constant 0 : i32
    %0 = arith.cmpi eq, %arg1, %c0_i32 : i32
    %1 = arith.extui %0 : i1 to i32
    %c0_i32_0 = arith.constant 0 : i32
    %2 = arith.cmpi ne, %1, %c0_i32_0 : i32
    scf.if %2 {
      %10 = tpu.iota {dimensions = array<i32: 1>} : vector<24x128xi32>
      %c0_8 = arith.constant 0 : index
      %c0_9 = arith.constant 0 : index
      %11 = vector.load %arg2[%c0_8, %c0_9] : memref<24x1xi32, #tpu.memory_space<vmem>>, vector<24x1xi32>
      %12 = vector.broadcast %11 : vector<24x1xi32> to vector<24x128xi32>
      %13 = arith.cmpi eq, %10, %12 : vector<24x128xi32>
      %c0_10 = arith.constant 0 : index
      %c0_11 = arith.constant 0 : index
      %14 = vector.load %arg3[%c0_10, %c0_11] : memref<24x1xi32, #tpu.memory_space<vmem>>, vector<24x1xi32>
      %15 = vector.broadcast %14 : vector<24x1xi32> to vector<24x128xi32>
      %16 = arith.cmpi eq, %10, %15 : vector<24x128xi32>
      %17 = arith.ori %13, %16 : vector<24x128xi1>
      %18 = arith.extui %17 : vector<24x128xi1> to vector<24x128xi32>
      %19 = arith.sitofp %18 : vector<24x128xi32> to vector<24x128xf32>
      %20 = arith.truncf %19 : vector<24x128xf32> to vector<24x128xbf16>
      %c0_12 = arith.constant 0 : index
      %c0_13 = arith.constant 0 : index
      %21 = vector.load %arg4[%c0_12, %c0_13] : memref<128x128xbf16, #tpu.memory_space<vmem>>, vector<128x128xbf16>
      %cst_14 = arith.constant dense<0.000000e+00> : vector<24x128xf32>
      %22 = tpu.matmul %20, %21, %cst_14 {dimension_numbers = #tpu.dot_dimension_numbers<[1], [0], [0], [1], [0, 0, 1, 1], [], []>} : vector<24x128xbf16>, vector<128x128xbf16>, vector<24x128xf32> -> vector<24x128xf32>
      %23 = arith.truncf %22 : vector<24x128xf32> to vector<24x128xbf16>
      %c0_15 = arith.constant 0 : index
      %c0_16 = arith.constant 0 : index
      %24 = vector.load %arg8[%c0_15, %c0_16] : memref<24x128xbf16, #tpu.memory_space<vmem>>, vector<24x128xbf16>
      tpu.vector_store %arg8[%c0_15, %c0_16], %23 {strides = array<i32>} : memref<24x128xbf16, #tpu.memory_space<vmem>>, vector<24x128xbf16>,
    } else {
    }
    %c0 = arith.constant 0 : index
    %c0_1 = arith.constant 0 : index
    %3 = vector.load %arg8[%c0, %c0_1] : memref<24x128xbf16, #tpu.memory_space<vmem>>, vector<24x128xbf16>
    %c0_2 = arith.constant 0 : index
    %c0_3 = arith.constant 0 : index
    %4 = vector.load %arg5[%c0_2, %c0_3] : memref<128x128xbf16, #tpu.memory_space<vmem>>, vector<128x128xbf16>
    %cst = arith.constant dense<0.000000e+00> : vector<24x128xf32>
    %5 = tpu.matmul %3, %4, %cst {dimension_numbers = #tpu.dot_dimension_numbers<[1], [0], [0], [1], [0, 0, 1, 1], [], []>} : vector<24x128xbf16>, vector<128x128xbf16>, vector<24x128xf32> -> vector<24x128xf32>
    %c0_4 = arith.constant 0 : index
    %c0_5 = arith.constant 0 : index
    %6 = vector.load %arg6[%c0_4, %c0_5] : memref<1x128xf32, #tpu.memory_space<vmem>>, vector<1x128xf32>
    %7 = vector.broadcast %6 : vector<1x128xf32> to vector<24x128xf32>
    %8 = arith.addf %5, %7 : vector<24x128xf32>
    %c0_6 = arith.constant 0 : index
    %c0_7 = arith.constant 0 : index
    %9 = vector.load %arg7[%c0_6, %c0_7] : memref<24x128xf32, #tpu.memory_space<vmem>>, vector<24x128xf32>
    tpu.vector_store %arg7[%c0_6, %c0_7], %8 {strides = array<i32>} : memref<24x128xf32, #tpu.memory_space<vmem>>, vector<24x128xf32>,
    return
  }
  func.func @transform_0(%arg0: i32, %arg1: i32) -> (i32, i32) {
    %c0_i32 = arith.constant 0 : i32
    %c0_i32_0 = arith.constant 0 : i32
    return %arg0, %c0_i32 : i32, i32
  }
  func.func @transform_1(%arg0: i32, %arg1: i32) -> (i32, i32) {
    %c0_i32 = arith.constant 0 : i32
    %c0_i32_0 = arith.constant 0 : i32
    return %arg0, %c0_i32 : i32, i32
  }
  func.func @transform_2(%arg0: i32, %arg1: i32) -> (i32, i32) {
    %c0_i32 = arith.constant 0 : i32
    %c0_i32_0 = arith.constant 0 : i32
    %c0_i32_1 = arith.constant 0 : i32
    return %c0_i32, %c0_i32_0 : i32, i32
  }
  func.func @transform_3(%arg0: i32, %arg1: i32) -> (i32, i32) {
    %c0_i32 = arith.constant 0 : i32
    %c0_i32_0 = arith.constant 0 : i32
    return %c0_i32, %arg1 : i32, i32
  }
  func.func @transform_4(%arg0: i32, %arg1: i32) -> (i32, i32) {
    %c0_i32 = arith.constant 0 : i32
    %c0_i32_0 = arith.constant 0 : i32
    return %c0_i32, %arg1 : i32, i32
  }
  func.func @transform_5(%arg0: i32, %arg1: i32) -> (i32, i32) {
    %c0_i32 = arith.constant 0 : i32
    return %arg0, %arg1 : i32, i32
  }
}

</mosaic_0001>

<llo_original>
// kernel: actor_forward.1
$region0: #{actor_forward.1}
  #allocation0 [shape = 'u32[]', space=smem, size = 0x4, offset = 0x4, fixed_abs, tag = 'smem constant byte address 0x4 - core index']
  #allocation1 [shape = 'u32[72,128]{1,0:T(1,128)}', space=vmem, size = 0x9000, scoped, tag = 'internal scratch']
  #allocation2 [shape = 'bf16[24,128]{1,0:T(8,128)(2,1)}', space=vmem, size = 0x1800, scoped, tag = 'scratch operand']
  %s0 = inlined_call_operand.vmem [shape: s32[48,1], index: 0, kind: input, shape index: {}]
  %s1 = inlined_call_operand.vmem [shape: s32[48,1], index: 1, kind: input, shape index: {}]
  %s2 = inlined_call_operand.vmem [shape: bf16[128,128], index: 2, kind: input, shape index: {}]
  %s3 = inlined_call_operand.vmem [shape: bf16[128,128], index: 3, kind: input, shape index: {}]
  %s4 = inlined_call_operand.vmem [shape: f32[1,128], index: 4, kind: input, shape index: {}]
  %s5 = inlined_call_operand.vmem [shape: f32[48,128], index: 5, kind: output, shape index: {}]
  %s6 = sld [smem:[#allocation0]]
  $region57: #{actor_forward.1} parent=0
    _
  %s8 = ssub.s32 1, %s6
  %s9 = scalar_select 0, %s8, %s6
  loop: start=0, step=1, limit=4
  $region2: #{actor_forward.1} parent=0 // loop_pre_header
    _
  $region3: #{actor_forward.1} parent=0 // loop_header
    %s11 = sphi 0, %s15
    %p12 = scmp.ge.s32.totalorder %s11, 4
    %s18 = sphi 0, %s30
    %s19 = sphi 0, %s26
    %s20 = sphi 0, %s18
    %s21 = sphi 0, %s19
    %s22 = sphi 0, %s20
    %s23 = sphi 0, %s21
    %s33 = sphi 0, %s35
    %s36 = sphi 0, %s33
    %s37 = sphi 0, %s36
    %s53 = sphi 0, %s37
    %s59 = sphi 0, %s61
    %s62 = sphi 0, %s59
    %s63 = sphi 0, %s62
    %s79 = sphi 0, %s63
    %s83 = sphi 0, %s83
    %s85 = sphi 0, %s83
    %s86 = sphi 0, %s85
    %s100 = sphi 0, %s86
    %s106 = sphi 0, %s108
    %s109 = sphi 0, %s106
    %s110 = sphi 0, %s109
    %s126 = sphi 0, %s110
    %s132 = sphi 0, %s134
    %s135 = sphi 0, %s132
    %s136 = sphi 0, %s135
    %s152 = sphi 0, %s136
    %s160 = sphi 0, %s162
    %s163 = sphi 0, %s160
    %s164 = sphi 0, %s163
    %s180 = sphi 0, %s164
  $region4: #{actor_forward.1} parent=0 // loop_header_branch
    %14 = sbr.rel (%p12) target = $region8
  $region5: #{actor_forward.1} parent=0 // loop_body
    %s16 = ssub.s32 %s11, 1
    %s17 = ssub.s32 %s11, 2
    %s24 = sadd.s32 1, %s19
    %p25 = scmp.ge.s32.totalorder %s24, 1
    %s26 = scalar_select %p25, 0, %s24
    %s27 = sadd.s32 1, %s18
    %s28 = scalar_select %p25, %s27, %s18
    %p29 = scmp.ge.s32.totalorder %s28, 2
    %s30 = scalar_select %p29, 0, %s28
    %s31 = ssub.s32 %s18, %s30
    %p32 = scmp.eq.s32.totalorder %s31, 0
    %s34 = sadd.s32 %s33, 1
    %s35 = scalar_select %p32, %s33, %s34
    %p38 = pneg %p32
    %p39 = scmp.eq.s32.totalorder %s11, 1
    %p40 = por %p38, %p39
    %p41 = scmp.ne.s32.totalorder %s33, %s36
    %p42 = scmp.eq.s32.totalorder %s11, 0
    %p43 = por %p41, %p42
    %p44 = scmp.ne.s32.totalorder %s33, %s36
    %p45 = scmp.eq.s32.totalorder %s16, 1
    %p46 = por %p44, %p45
    %p47 = scmp.ne.s32.totalorder %s36, %s37
    %p48 = scmp.eq.s32.totalorder %s16, 0
    %p49 = por %p47, %p48
    %p50 = scmp.ne.s32.totalorder %s36, %s37
    %p51 = scmp.eq.s32.totalorder %s17, 1
    %p52 = por %p50, %p51
    %p54 = scmp.ne.s32.totalorder %s37, %s53
    %p55 = scmp.eq.s32.totalorder %s17, 0
    %p56 = por %p54, %p55
    %s57 = ssub.s32 %s18, %s30
    %p58 = scmp.eq.s32.totalorder %s57, 0
    %s60 = sadd.s32 %s59, 1
    %s61 = scalar_select %p58, %s59, %s60
    %p64 = pneg %p58
    %p65 = scmp.eq.s32.totalorder %s11, 1
    %p66 = por %p64, %p65
    %p67 = scmp.ne.s32.totalorder %s59, %s62
    %p68 = scmp.eq.s32.totalorder %s11, 0
    %p69 = por %p67, %p68
    %p70 = scmp.ne.s32.totalorder %s59, %s62
    %p71 = scmp.eq.s32.totalorder %s16, 1
    %p72 = por %p70, %p71
    %p73 = scmp.ne.s32.totalorder %s62, %s63
    %p74 = scmp.eq.s32.totalorder %s16, 0
    %p75 = por %p73, %p74
    %p76 = scmp.ne.s32.totalorder %s62, %s63
    %p77 = scmp.eq.s32.totalorder %s17, 1
    %p78 = por %p76, %p77
    %p80 = scmp.ne.s32.totalorder %s63, %s79
    %p81 = scmp.eq.s32.totalorder %s17, 0
    %p82 = por %p80, %p81
    %s84 = sadd.s32 %s83, 1
    %p87 = scmp.eq.s32.totalorder %s11, 1
    %p88 = scmp.ne.s32.totalorder %s83, %s85
    %p89 = scmp.eq.s32.totalorder %s11, 0
    %p90 = por %p88, %p89
    %p91 = scmp.ne.s32.totalorder %s83, %s85
    %p92 = scmp.eq.s32.totalorder %s16, 1
    %p93 = por %p91, %p92
    %p94 = scmp.ne.s32.totalorder %s85, %s86
    %p95 = scmp.eq.s32.totalorder %s16, 0
    %p96 = por %p94, %p95
    %p97 = scmp.ne.s32.totalorder %s85, %s86
    %p98 = scmp.eq.s32.totalorder %s17, 1
    %p99 = por %p97, %p98
    %p101 = scmp.ne.s32.totalorder %s86, %s100
    %p102 = scmp.eq.s32.totalorder %s17, 0
    %p103 = por %p101, %p102
    %s104 = ssub.s32 %s19, %s26
    %p105 = scmp.eq.s32.totalorder %s104, 0
    %s107 = sadd.s32 %s106, 1
    %s108 = scalar_select %p105, %s106, %s107
    %p111 = pneg %p105
    %p112 = scmp.eq.s32.totalorder %s11, 1
    %p113 = por %p111, %p112
    %p114 = scmp.ne.s32.totalorder %s106, %s109
    %p115 = scmp.eq.s32.totalorder %s11, 0
    %p116 = por %p114, %p115
    %p117 = scmp.ne.s32.totalorder %s106, %s109
    %p118 = scmp.eq.s32.totalorder %s16, 1
    %p119 = por %p117, %p118
    %p120 = scmp.ne.s32.totalorder %s109, %s110
    %p121 = scmp.eq.s32.totalorder %s16, 0
    %p122 = por %p120, %p121
    %p123 = scmp.ne.s32.totalorder %s109, %s110
    %p124 = scmp.eq.s32.totalorder %s17, 1
    %p125 = por %p123, %p124
    %p127 = scmp.ne.s32.totalorder %s110, %s126
    %p128 = scmp.eq.s32.totalorder %s17, 0
    %p129 = por %p127, %p128
    %s130 = ssub.s32 %s19, %s26
    %p131 = scmp.eq.s32.totalorder %s130, 0
    %s133 = sadd.s32 %s132, 1
    %s134 = scalar_select %p131, %s132, %s133
    %p137 = pneg %p131
    %p138 = scmp.eq.s32.totalorder %s11, 1
    %p139 = por %p137, %p138
    %p140 = scmp.ne.s32.totalorder %s132, %s135
    %p141 = scmp.eq.s32.totalorder %s11, 0
    %p142 = por %p140, %p141
    %p143 = scmp.ne.s32.totalorder %s132, %s135
    %p144 = scmp.eq.s32.totalorder %s16, 1
    %p145 = por %p143, %p144
    %p146 = scmp.ne.s32.totalorder %s135, %s136
    %p147 = scmp.eq.s32.totalorder %s16, 0
    %p148 = por %p146, %p147
    %p149 = scmp.ne.s32.totalorder %s135, %s136
    %p150 = scmp.eq.s32.totalorder %s17, 1
    %p151 = por %p149, %p150
    %p153 = scmp.ne.s32.totalorder %s136, %s152
    %p154 = scmp.eq.s32.totalorder %s17, 0
    %p155 = por %p153, %p154
    %s156 = ssub.s32 %s18, %s30
    %s157 = ssub.s32 %s19, %s26
    %s158 = sor.u32 %s156, %s157
    %p159 = scmp.eq.s32.totalorder %s158, 0
    %s161 = sadd.s32 %s160, 1
    %s162 = scalar_select %p159, %s160, %s161
    %p165 = pneg %p159
    %p166 = scmp.eq.s32.totalorder %s11, 1
    %p167 = por %p165, %p166
    %p168 = scmp.ne.s32.totalorder %s160, %s163
    %p169 = scmp.eq.s32.totalorder %s11, 0
    %p170 = por %p168, %p169
    %p171 = scmp.ne.s32.totalorder %s160, %s163
    %p172 = scmp.eq.s32.totalorder %s16, 1
    %p173 = por %p171, %p172
    %p174 = scmp.ne.s32.totalorder %s163, %s164
    %p175 = scmp.eq.s32.totalorder %s16, 0
    %p176 = por %p174, %p175
    %p177 = scmp.ne.s32.totalorder %s163, %s164
    %p178 = scmp.eq.s32.totalorder %s17, 1
    %p179 = por %p177, %p178
    %p181 = scmp.ne.s32.totalorder %s164, %s180
    %p182 = scmp.eq.s32.totalorder %s17, 0
    %p183 = por %p181, %p182
    %p184 = scmp.le.s32.totalorder 1, %s11
    %p185 = scmp.lt.s32.totalorder %s11, 3
    %p186 = pnand %p184, %p185
    %p187 = pneg %p186
    // Predicated region
    $region9: #{actor_forward.1} parent=5 // pred_check
      _
    $region10: #{actor_forward.1} parent=5 // pred_check_branch
      %189 = sbr.rel (%p186) target = $region12
    $region11: #{actor_forward.1} parent=5 // pred_region
      %s190 = ssub.s32 %s11, 1
      // Predicated region
      $region13: #{actor_forward.1} parent=11 // pred_check
        %p191 = pneg %p96
      $region14: #{actor_forward.1} parent=11 // pred_check_branch
        %193 = sbr.rel (%p191) target = $region16
      $region15: #{actor_forward.1} parent=11 // pred_region
        _
      $region16: #{actor_forward.1} parent=11 // pred_fallthru
        _
      // Predicated region
      $region17: #{actor_forward.1} parent=11 // pred_check
        %p194 = pneg %p122
      $region18: #{actor_forward.1} parent=11 // pred_check_branch
        %196 = sbr.rel (%p194) target = $region20
      $region19: #{actor_forward.1} parent=11 // pred_region
        %p197 = scmp.lt.s32.totalorder %s21, 0
        %s198 = scalar_select %p197, %s21, 0
        %s199 = smul.addr %s198, 4
        %s200 = scalar_lea.vmem %s3, %s199
      $region20: #{actor_forward.1} parent=11 // pred_fallthru
        _
      // Predicated region
      $region21: #{actor_forward.1} parent=11 // pred_check
        %p201 = pneg %p148
      $region22: #{actor_forward.1} parent=11 // pred_check_branch
        %203 = sbr.rel (%p201) target = $region24
      $region23: #{actor_forward.1} parent=11 // pred_region
        %p204 = scmp.lt.s32.totalorder %s21, 0
        %s205 = scalar_select %p204, %s21, 0
        %s206 = scalar_lea.vmem %s4, %s205
      $region24: #{actor_forward.1} parent=11 // pred_fallthru
        _
    $region12: #{actor_forward.1} parent=5 // pred_fallthru
      _
    %p207 = scmp.lt.s32.totalorder %s11, 2
    // Predicated region
    $region25: #{actor_forward.1} parent=5 // pred_check
      %p208 = pneg %p207
    $region26: #{actor_forward.1} parent=5 // pred_check_branch
      %210 = sbr.rel (%p208) target = $region28
    $region27: #{actor_forward.1} parent=5 // pred_region
      // Predicated region
      $region29: #{actor_forward.1} parent=27 // pred_check
        %p211 = pneg %p43
      $region30: #{actor_forward.1} parent=27 // pred_check_branch
        %213 = sbr.rel (%p211) target = $region32
      $region31: #{actor_forward.1} parent=27 // pred_region
        %s214 = smul.u32 3, %s18
        %p215 = scmp.lt.s32.totalorder %s214, 5
        %s216 = scalar_select %p215, %s214, 5
        %s217 = smul.addr %s216, 8
        %s218 = scalar_lea.vmem %s0, %s217
        %s219 = smul.u32 3, %s18
      $region32: #{actor_forward.1} parent=27 // pred_fallthru
        _
      // Predicated region
      $region33: #{actor_forward.1} parent=27 // pred_check
        %p220 = pneg %p69
      $region34: #{actor_forward.1} parent=27 // pred_check_branch
        %222 = sbr.rel (%p220) target = $region36
      $region35: #{actor_forward.1} parent=27 // pred_region
        %s223 = smul.u32 3, %s18
        %p224 = scmp.lt.s32.totalorder %s223, 5
        %s225 = scalar_select %p224, %s223, 5
        %s226 = smul.addr %s225, 8
        %s227 = scalar_lea.vmem %s1, %s226
        %s228 = smul.u32 3, %s18
      $region36: #{actor_forward.1} parent=27 // pred_fallthru
        _
    $region28: #{actor_forward.1} parent=5 // pred_fallthru
      _
    %p229 = scmp.le.s32.totalorder 1, %s11
    %p230 = scmp.lt.s32.totalorder %s11, 3
    %p231 = pnand %p229, %p230
    %p232 = pneg %p231
    // Predicated region
    $region37: #{actor_forward.1} parent=5 // pred_check
      _
    $region38: #{actor_forward.1} parent=5 // pred_check_branch
      %234 = sbr.rel (%p231) target = $region40
    $region39: #{actor_forward.1} parent=5 // pred_region
      %s235 = ssub.s32 %s11, 1
      %s236 = smul.u32 3, %s20
      %p237 = scmp.lt.s32.totalorder %s236, 5
      %s238 = scalar_select %p237, %s236, 5
      %s239 = smul.addr %s238, 8
      %s240 = scalar_lea.vmem %s0, %s239
      %p241 = pneg %p49
      %p242 = pneg %p46
      %s243 = smul.u32 3, %s20
      %p244 = scmp.lt.s32.totalorder %s243, 5
      %s245 = scalar_select %p244, %s243, 5
      %s246 = smul.addr %s245, 8
      %s247 = scalar_lea.vmem %s1, %s246
      %p248 = pneg %p75
      %p249 = pneg %p72
      %p250 = pneg %p96
      %p251 = pneg %p93
      %p252 = scmp.lt.s32.totalorder %s21, 0
      %s253 = scalar_select %p252, %s21, 0
      %s254 = smul.addr %s253, 4
      %s255 = scalar_lea.vmem %s3, %s254
      %p256 = pneg %p122
      %p257 = pneg %p119
      %p258 = scmp.lt.s32.totalorder %s21, 0
      %s259 = scalar_select %p258, %s21, 0
      %s260 = scalar_lea.vmem %s4, %s259
      %p261 = pneg %p148
      %p262 = pneg %p145
      %p263 = pneg %p176
      %p264 = pneg %p173
      %s265 = smul.u32 3, %s20
      %p266 = scmp.lt.s32.totalorder %s265, 5
      %s267 = scalar_select %p266, %s265, 5
      %p268 = scmp.lt.s32.totalorder %s21, 0
      %s269 = scalar_select %p268, %s21, 0
      %s270 = sadd.s32 %s269, %s267
      %s271 = smul.addr %s270, 8
      %s272 = scalar_lea.vmem %s5, %s271
      %s273 = smul.u32 3, %s20
      %p274 = scmp.lt.s32.totalorder %s273, 5
      %s275 = scalar_select %p274, %s273, 5
      %s276 = smul.addr %s275, 8
      %s277 = scalar_lea.vmem %s0, %s276
      %s278 = smul.u32 3, %s20
      %s279 = smul.u32 3, %s20
      %p280 = scmp.lt.s32.totalorder %s279, 5
      %s281 = scalar_select %p280, %s279, 5
      %s282 = smul.addr %s281, 8
      %s283 = scalar_lea.vmem %s1, %s282
      %s284 = smul.u32 3, %s20
      %p285 = scmp.lt.s32.totalorder %s21, 0
      %s286 = scalar_select %p285, %s21, 0
      %s287 = smul.addr %s286, 4
      %s288 = scalar_lea.vmem %s3, %s287
      %p289 = scmp.lt.s32.totalorder %s21, 0
      %s290 = scalar_select %p289, %s21, 0
      %s291 = scalar_lea.vmem %s4, %s290
      %s292 = smul.u32 3, %s20
      %p293 = scmp.lt.s32.totalorder %s292, 5
      %s294 = scalar_select %p293, %s292, 5
      %p295 = scmp.lt.s32.totalorder %s21, 0
      %s296 = scalar_select %p295, %s21, 0
      %s297 = sadd.s32 %s296, %s294
      %s298 = smul.addr %s297, 8
      %s299 = scalar_lea.vmem %s5, %s298
      %s300 = smul.u32 3, %s20
      %p301 = scmp.eq.s32.totalorder %s21, 0
      // Predicated region
      $region41: #{actor_forward.1} parent=39 // pred_check
        %p302 = pneg %p301
      $region42: #{actor_forward.1} parent=39 // pred_check_branch
        %304 = sbr.rel (%p302) target = $region44
      $region43: #{actor_forward.1} parent=39 // pred_region
        %v305 = vlaneseq
        %v306 = vand.u32 %v305, 127
        %v307 = vld [vmem:[%s277] sm:$0xff]
        %v308 = vld [vmem:[%s277 + $0x8] sm:$0xff]
        %v309 = vld [vmem:[%s277 + $0x10] sm:$0xff]
        %310 = vset.pattern.permute.xlu0 0
        %311 = vperm.xlu0 %310, %v307
        %v312 = vpop.permute.xlu0 %311
        %313 = vset.pattern.permute.xlu0 0
        %314 = vperm.xlu0 %313, %v308
        %v315 = vpop.permute.xlu0 %314
        %316 = vset.pattern.permute.xlu0 0
        %317 = vperm.xlu0 %316, %v309
        %v318 = vpop.permute.xlu0 %317
        %vm319 = vcmp.eq.s32.totalorder %v306, %v312
        %vm320 = vcmp.eq.s32.totalorder %v306, %v315
        %vm321 = vcmp.eq.s32.totalorder %v306, %v318
        %v322 = vld [vmem:[%s283] sm:$0xff]
        %v323 = vld [vmem:[%s283 + $0x8] sm:$0xff]
        %v324 = vld [vmem:[%s283 + $0x10] sm:$0xff]
        %325 = vset.pattern.permute.xlu0 0
        %326 = vperm.xlu0 %325, %v322
        %v327 = vpop.permute.xlu0 %326
        %328 = vset.pattern.permute.xlu0 0
        %329 = vperm.xlu0 %328, %v323
        %v330 = vpop.permute.xlu0 %329
        %331 = vset.pattern.permute.xlu0 0
        %332 = vperm.xlu0 %331, %v324
        %v333 = vpop.permute.xlu0 %332
        %vm334 = vcmp.eq.s32.totalorder %v306, %v327
        %vm335 = vcmp.eq.s32.totalorder %v306, %v330
        %vm336 = vcmp.eq.s32.totalorder %v306, %v333
        %vm337 = vmor %vm319, %vm334
        %vm338 = vmor %vm320, %vm335
        %vm339 = vmor %vm321, %vm336
        %v340 = vsel %vm337, 1, 0
        %v341 = vsel %vm338, 1, 0
        %v342 = vsel %vm339, 1, 0
        %v343 = vcvt.s32.f32 %v340
        %v344 = vcvt.s32.f32 %v341
        %v345 = vcvt.s32.f32 %v342
        %v346 = vpack.c.bf16 %v344, %v343
        %v347 = vpack.c.bf16 %v345, %v345
        %v348 = vld [vmem:[%s2] sm:$0xf]
        %v349 = vld [vmem:[%s2 + $0x4] sm:$0xf]
        %v350 = vld [vmem:[%s2 + $0x8] sm:$0xf]
        %v351 = vld [vmem:[%s2 + $0xc] sm:$0xf]
        %v352 = vld [vmem:[%s2 + $0x10] sm:$0xf]
        %v353 = vld [vmem:[%s2 + $0x14] sm:$0xf]
        %v354 = vld [vmem:[%s2 + $0x18] sm:$0xf]
        %v355 = vld [vmem:[%s2 + $0x1c] sm:$0xf]
        %v356 = vld [vmem:[%s2 + $0x20] sm:$0xf]
        %v357 = vld [vmem:[%s2 + $0x24] sm:$0xf]
        %v358 = vld [vmem:[%s2 + $0x28] sm:$0xf]
        %v359 = vld [vmem:[%s2 + $0x2c] sm:$0xf]
        %v360 = vld [vmem:[%s2 + $0x30] sm:$0xf]
        %v361 = vld [vmem:[%s2 + $0x34] sm:$0xf]
        %v362 = vld [vmem:[%s2 + $0x38] sm:$0xf]
        %v363 = vld [vmem:[%s2 + $0x3c] sm:$0xf]
        %v380 = vunpack.c.l.b16 %v348
        %v381 = vunpack.c.l.b16 %v349
        %v382 = vunpack.c.l.b16 %v350
        %v383 = vunpack.c.l.b16 %v351
        %v384 = vunpack.c.l.b16 %v352
        %v385 = vunpack.c.l.b16 %v353
        %v386 = vunpack.c.l.b16 %v354
        %v387 = vunpack.c.l.b16 %v355
        %v388 = vunpack.c.l.b16 %v356
        %v389 = vunpack.c.l.b16 %v357
        %v390 = vunpack.c.l.b16 %v358
        %v391 = vunpack.c.l.b16 %v359
        %v392 = vunpack.c.l.b16 %v360
        %v393 = vunpack.c.l.b16 %v361
        %v394 = vunpack.c.l.b16 %v362
        %v395 = vunpack.c.l.b16 %v363
        %v396 = vpack.c.b16 %v381, %v380
        %v397 = vpack.c.b16 %v383, %v382
        %v398 = vpack.c.b16 %v385, %v384
        %v399 = vpack.c.b16 %v387, %v386
        %v400 = vpack.c.b16 %v389, %v388
        %v401 = vpack.c.b16 %v391, %v390
        %v402 = vpack.c.b16 %v393, %v392
        %v403 = vpack.c.b16 %v395, %v394
        %412 = vmatpush.bf16.msra.mxu0 %v403
        %413 = vmatpush.bf16.msra.mxu0 %v402
        %414 = vmatpush.bf16.msra.mxu0 %v401
        %415 = vmatpush.bf16.msra.mxu0 %v400
        %416 = vmatpush.bf16.msra.mxu0 %v399
        %417 = vmatpush.bf16.msra.mxu0 %v398
        %418 = vmatpush.bf16.msra.mxu0 %v397
        %419 = vmatpush.bf16.msra.mxu0 %v396
        %420 = vmatmul.bf16.gmra.mxu0 %v346
        %v421 = vpop.f32.mrf.mxu0
        %v422 = vadd.f32 0.0, %v421
        %v423 = vpop.f32.mrf.mxu0
        %v424 = vadd.f32 0.0, %v423
        %425 = vmatmul.bf16.gmra.mxu0 %v347
        %v426 = vpop.f32.mrf.mxu0
        %v427 = vadd.f32 0.0, %v426
        %v428 = vpop.f32.mrf.mxu0
        %429 = vdwg.mxu0
        %v430 = vpack.c.bf16 %v422, %v422
        %v431 = vpack.c.bf16 %v424, %v424
        %v432 = vpack.c.bf16 %v427, %v427
        %433 = vst [vmem:[#allocation2] sm:$0xf] %v430
        %434 = vst [vmem:[#allocation2 + $0x4] sm:$0xf] %v431
        %435 = vst [vmem:[#allocation2 + $0x8] sm:$0xf] %v432
      $region44: #{actor_forward.1} parent=39 // pred_fallthru
        _
      %v436 = vld [vmem:[#allocation2] sm:$0xf]
      %v437 = vld [vmem:[#allocation2 + $0x4] sm:$0xf]
      %v438 = vld [vmem:[#allocation2 + $0x8] sm:$0xf]
      %v439 = vld [vmem:[%s288] sm:$0xf]
      %v440 = vld [vmem:[%s288 + $0x4] sm:$0xf]
      %v441 = vld [vmem:[%s288 + $0x8] sm:$0xf]
      %v442 = vld [vmem:[%s288 + $0xc] sm:$0xf]
      %v443 = vld [vmem:[%s288 + $0x10] sm:$0xf]
      %v444 = vld [vmem:[%s288 + $0x14] sm:$0xf]
      %v445 = vld [vmem:[%s288 + $0x18] sm:$0xf]
      %v446 = vld [vmem:[%s288 + $0x1c] sm:$0xf]
      %v447 = vld [vmem:[%s288 + $0x20] sm:$0xf]
      %v448 = vld [vmem:[%s288 + $0x24] sm:$0xf]
      %v449 = vld [vmem:[%s288 + $0x28] sm:$0xf]
      %v450 = vld [vmem:[%s288 + $0x2c] sm:$0xf]
      %v451 = vld [vmem:[%s288 + $0x30] sm:$0xf]
      %v452 = vld [vmem:[%s288 + $0x34] sm:$0xf]
      %v453 = vld [vmem:[%s288 + $0x38] sm:$0xf]
      %v454 = vld [vmem:[%s288 + $0x3c] sm:$0xf]
      %v455 = vld [vmem:[%s291] sm:$0x1]
      %v457 = vperm.slane %v455, 0
      %v462 = vunpack.c.l.b16 %v436
      %v463 = vunpack.c.l.b16 %v437
      %v464 = vunpack.c.l.b16 %v438
      %v465 = vpack.c.b16 %v463, %v462
      %v466 = vpack.c.b16 %v464, %v464
      %v485 = vunpack.c.l.b16 %v439
      %v486 = vunpack.c.l.b16 %v440
      %v487 = vunpack.c.l.b16 %v441
      %v488 = vunpack.c.l.b16 %v442
      %v489 = vunpack.c.l.b16 %v443
      %v490 = vunpack.c.l.b16 %v444
      %v491 = vunpack.c.l.b16 %v445
      %v492 = vunpack.c.l.b16 %v446
      %v493 = vunpack.c.l.b16 %v447
      %v494 = vunpack.c.l.b16 %v448
      %v495 = vunpack.c.l.b16 %v449
      %v496 = vunpack.c.l.b16 %v450
      %v497 = vunpack.c.l.b16 %v451
      %v498 = vunpack.c.l.b16 %v452
      %v499 = vunpack.c.l.b16 %v453
      %v500 = vunpack.c.l.b16 %v454
      %v501 = vpack.c.b16 %v486, %v485
      %v502 = vpack.c.b16 %v488, %v487
      %v503 = vpack.c.b16 %v490, %v489
      %v504 = vpack.c.b16 %v492, %v491
      %v505 = vpack.c.b16 %v494, %v493
      %v506 = vpack.c.b16 %v496, %v495
      %v507 = vpack.c.b16 %v498, %v497
      %v508 = vpack.c.b16 %v500, %v499
      %517 = vmatpush.bf16.msra.mxu0 %v508
      %518 = vmatpush.bf16.msra.mxu0 %v507
      %519 = vmatpush.bf16.msra.mxu0 %v506
      %520 = vmatpush.bf16.msra.mxu0 %v505
      %521 = vmatpush.bf16.msra.mxu0 %v504
      %522 = vmatpush.bf16.msra.mxu0 %v503
      %523 = vmatpush.bf16.msra.mxu0 %v502
      %524 = vmatpush.bf16.msra.mxu0 %v501
      %525 = vmatmul.bf16.gmra.mxu0 %v465
      %v526 = vpop.f32.mrf.mxu0
      %v527 = vadd.f32 %v457, %v526
      %v528 = vpop.f32.mrf.mxu0
      %v529 = vadd.f32 %v457, %v528
      %530 = vmatmul.bf16.gmra.mxu0 %v466
      %v531 = vpop.f32.mrf.mxu0
      %v532 = vadd.f32 %v457, %v531
      %v533 = vpop.f32.mrf.mxu0
      %534 = vdwg.mxu0
      %535 = vst [vmem:[%s299] sm:$0xff] %v527
      %536 = vst [vmem:[%s299 + $0x8] sm:$0xff] %v529
      %537 = vst [vmem:[%s299 + $0x10] sm:$0xff] %v532
      %s538 = smul.u32 3, %s20
      %p539 = scmp.lt.s32.totalorder %s538, 5
      %s540 = scalar_select %p539, %s538, 5
      %p541 = scmp.lt.s32.totalorder %s21, 0
      %s542 = scalar_select %p541, %s21, 0
      %s543 = sadd.s32 %s542, %s540
      %s544 = smul.addr %s543, 8
      %s545 = scalar_lea.vmem %s5, %s544
      // Predicated region
      $region45: #{actor_forward.1} parent=39 // pred_check
        %p546 = pneg %p173
      $region46: #{actor_forward.1} parent=39 // pred_check_branch
        %548 = sbr.rel (%p546) target = $region48
      $region47: #{actor_forward.1} parent=39 // pred_region
        %s549 = smul.u32 3, %s20
      $region48: #{actor_forward.1} parent=39 // pred_fallthru
        _
    $region40: #{actor_forward.1} parent=5 // pred_fallthru
      _
    %p550 = scmp.le.s32.totalorder 2, %s11
    // Predicated region
    $region49: #{actor_forward.1} parent=5 // pred_check
      %p551 = pneg %p550
    $region50: #{actor_forward.1} parent=5 // pred_check_branch
      %553 = sbr.rel (%p551) target = $region52
    $region51: #{actor_forward.1} parent=5 // pred_region
      %s554 = ssub.s32 %s11, 2
      // Predicated region
      $region53: #{actor_forward.1} parent=51 // pred_check
        %p555 = pneg %p179
      $region54: #{actor_forward.1} parent=51 // pred_check_branch
        %557 = sbr.rel (%p555) target = $region56
      $region55: #{actor_forward.1} parent=51 // pred_region
        %s558 = smul.u32 3, %s22
        %p559 = scmp.lt.s32.totalorder %s558, 5
        %s560 = scalar_select %p559, %s558, 5
        %p561 = scmp.lt.s32.totalorder %s23, 0
        %s562 = scalar_select %p561, %s23, 0
        %s563 = sadd.s32 %s562, %s560
        %s564 = smul.addr %s563, 8
        %s565 = scalar_lea.vmem %s5, %s564
      $region56: #{actor_forward.1} parent=51 // pred_fallthru
        _
    $region52: #{actor_forward.1} parent=5 // pred_fallthru
      _
  $region6: #{actor_forward.1} parent=0 // loop_footer
    %s15 = sadd.s32 1, %s11
  $region7: #{actor_forward.1} parent=0 // loop_footer_branch
    %10 = sbr.rel target = $region3
  $region8: #{actor_forward.1} parent=0 // loop_exit
    _

</llo_original>
